<compile_context>
chip_gen: v7x
topology: tpu7x:2x2x1
jax: 0.10.0
libtpu: 0.0.40
codegen_flags: <defaults>
</compile_context>

<pallas_src>
import functools

import jax
import jax.numpy as jnp
from jax.experimental import pallas as pl
from jax.experimental.pallas import tpu as pltpu


def _rmsnorm_kernel(x_ref, w_ref, o_ref, *, eps: float):
    # x_ref: (TM, H) in input dtype; w_ref: (1, H); o_ref: (TM, H) in input dtype.
    x = x_ref[...].astype(jnp.float32)
    # Mean of squares along the lane axis (no mean subtraction in Gemma RMSNorm).
    mean_sq = jnp.mean(x * x, axis=-1, keepdims=True)
    inv = jax.lax.rsqrt(mean_sq + eps)              # EUP rsqrt (own VLIW slot)
    gamma = 1.0 + w_ref[...].astype(jnp.float32)    # (1, H), broadcasts over rows
    o_ref[...] = (x * inv * gamma).astype(o_ref.dtype)


def _round_up(x: int, m: int) -> int:
    return ((x + m - 1) // m) * m


def _vmem_capacity_bytes() -> int:
    """Physical per-core VMEM; conservative v7x value if the query fails."""
    try:
        return int(pltpu.get_tpu_info().vmem_capacity_bytes)
    except Exception:
        return 64 * 1024 * 1024


def _choose_block_rows(rows: int, hidden: int, dtype_bytes: int,
                       vmem_budget: int) -> int:
    """Largest dtype-aligned row tile that fits the live-buffer budget.

    Live VMEM per row ~= double-buffered input + output (4 * dtype_bytes * H)
    plus f32 temps (~8 * H bytes).
    """
    # Packed-dtype minimum sublane tile: 8 rows (f32), 16 (bf16), 32 (int8/fp8).
    min_rows = max(8, 32 // max(dtype_bytes, 1))

    per_row = hidden * (4 * dtype_bytes + 8)
    tm = max(min_rows, vmem_budget // max(per_row, 1))

    # Never allocate a tile larger than the (rounded-up) row count.
    tm = min(tm, _round_up(rows, min_rows))

    # Keep >= 2 grid steps when rows allow it, so v7x's two TensorCores
    # both get work under dimension_semantics=("parallel",).
    if rows > min_rows:
        tm = min(tm, _round_up(pl.cdiv(rows, 2), min_rows))

    # Round down to the dtype's sublane multiple, never below the minimum.
    tm = max(min_rows, (tm // min_rows) * min_rows)
    return tm


def gemma_rms_norm(x: jax.Array, weight: jax.Array, eps: float,
                   *, donate_x: bool = False) -> jax.Array:
    """Pallas TPU GemmaRMSNorm over the last axis of x."""
    orig_shape = x.shape
    hidden = orig_shape[-1]
    assert weight.shape == (hidden,)

    x2 = x.reshape(-1, hidden)
    rows = x2.shape[0]
    dtype_bytes = jnp.dtype(x.dtype).itemsize

    capacity = _vmem_capacity_bytes()
    # Live-buffer budget: half of physical VMEM, capped at 48 MiB (safe on
    # v7x's 64 MiB, generous on v5e/v6e's 128 MiB).
    vmem_budget = min(capacity // 2, 48 * 1024 * 1024)
    # Scoped VMEM limit raised above the default so the chosen tiles compile.
    vmem_limit = min((capacity * 3) // 4, 100 * 1024 * 1024)

    tm = _choose_block_rows(rows, hidden, dtype_bytes, vmem_budget)
    grid = (pl.cdiv(rows, tm),)  # ragged last block is masked by Pallas

    w2 = weight.reshape(1, hidden)

    out = pl.pallas_call(
        functools.partial(_rmsnorm_kernel, eps=float(eps)),
        out_shape=jax.ShapeDtypeStruct((rows, hidden), x.dtype),
        grid_spec=pltpu.PrefetchScalarGridSpec(
            num_scalar_prefetch=0,
            grid=grid,
            in_specs=[
                # Row tile of activations, streamed across the grid.
                pl.BlockSpec((tm, hidden), lambda i: (i, 0)),
                # gamma: resident — same (0, 0) block every grid step.
                pl.BlockSpec((1, hidden), lambda i: (0, 0)),
            ],
            out_specs=pl.BlockSpec((tm, hidden), lambda i: (i, 0)),
        ),
        compiler_params=pltpu.CompilerParams(
            dimension_semantics=("parallel",),  # megacore split on v7x
            vmem_limit_bytes=int(vmem_limit),
        ),
        input_output_aliases=({0: 0} if donate_x else {}),
    )(x2, w2)

    return out.reshape(orig_shape)


def _reference_rms_norm(x, weight, eps):
    xf = x.astype(jnp.float32)
    norm = xf * jax.lax.rsqrt(jnp.mean(xf * xf, axis=-1, keepdims=True) + eps)
    return (norm * (1.0 + weight.astype(jnp.float32))).astype(x.dtype)


if __name__ == "__main__":
    eps = 1e-6
    key = jax.random.PRNGKey(0)

    # Case 1: f32, rows not a multiple of the tile -> exercises the ragged
    # (masked) last block path.  batch=2, seq=9, hidden=256.
    B, S, H = 2, 9, 256
    kx, kw, kx2 = jax.random.split(key, 3)
    x = jax.random.normal(kx, (B, S, H), dtype=jnp.float32)
    weight = 0.1 * jax.random.normal(kw, (H,), dtype=jnp.float32)

    out = jax.block_until_ready(gemma_rms_norm(x, weight, eps))
    ref = _reference_rms_norm(x, weight, eps)
    assert out.shape == x.shape and out.dtype == x.dtype
    assert jnp.max(jnp.abs(out.astype(jnp.float32) - ref.astype(jnp.float32))) < 1e-4

    # Case 2: bf16 input (16-row sublane minimum), small row count.
    xb = jax.random.normal(kx2, (2, 8, H), dtype=jnp.float32).astype(jnp.bfloat16)
    outb = jax.block_until_ready(gemma_rms_norm(xb, weight, eps))
    refb = _reference_rms_norm(xb, weight, eps)
    assert outb.shape == xb.shape and outb.dtype == xb.dtype
    assert jnp.max(jnp.abs(outb.astype(jnp.float32) - refb.astype(jnp.float32))) < 2e-2

    print("KERNEL_OK")
</pallas_src>

<mosaic_0001>
module attributes {stable_mosaic.version = 11 : i64} {
  func.func @_rmsnorm_kernel(%arg0: i32, %arg1: memref<16x256xf32, #tpu.memory_space<vmem>>, %arg2: memref<1x256xf32, #tpu.memory_space<vmem>>, %arg3: memref<16x256xf32, #tpu.memory_space<vmem>>) attributes {dimension_semantics = [#tpu.dimension_semantics<parallel>], iteration_bounds = array<i64: 2>, scalar_prefetch = 0 : i64, scratch_operands = 0 : i64, tpu.core_type = #tpu.core_type<tc>, window_params = [{transform_indices = @transform_0, window_bounds = array<i64: 16, 256>}, {pipeline_mode = #tpu.pipeline_mode<synchronous>, transform_indices = @transform_1, window_bounds = array<i64: 1, 256>}, {transform_indices = @transform_2, window_bounds = array<i64: 16, 256>}]} {
    %c0 = arith.constant 0 : index
    %c0_0 = arith.constant 0 : index
    %0 = vector.load %arg1[%c0, %c0_0] : memref<16x256xf32, #tpu.memory_space<vmem>>, vector<16x256xf32>
    %1 = arith.mulf %0, %0 : vector<16x256xf32>
    %cst = arith.constant dense<0.000000e+00> : vector<16xf32>
    %2 = vector.multi_reduction <add>, %1, %cst [1] : vector<16x256xf32> to vector<16xf32>
    %3 = vector.shape_cast %2 : vector<16xf32> to vector<16x1xf32>
    %cst_1 = arith.constant 2.560000e+02 : f32
    %4 = vector.broadcast %cst_1 : f32 to vector<16x1xf32>
    %5 = arith.divf %3, %4 : vector<16x1xf32>
    %cst_2 = arith.constant 9.99999997E-7 : f32
    %6 = vector.broadcast %cst_2 : f32 to vector<16x1xf32>
    %7 = arith.addf %5, %6 : vector<16x1xf32>
    %8 = math.rsqrt %7 : vector<16x1xf32>
    %c0_3 = arith.constant 0 : index
    %c0_4 = arith.constant 0 : index
    %9 = vector.load %arg2[%c0_3, %c0_4] : memref<1x256xf32, #tpu.memory_space<vmem>>, vector<1x256xf32>
    %cst_5 = arith.constant 1.000000e+00 : f32
    %10 = vector.broadcast %cst_5 : f32 to vector<1x256xf32>
    %11 = arith.addf %10, %9 : vector<1x256xf32>
    %12 = vector.broadcast %8 : vector<16x1xf32> to vector<16x256xf32>
    %13 = arith.mulf %0, %12 : vector<16x256xf32>
    %14 = vector.broadcast %11 : vector<1x256xf32> to vector<16x256xf32>
    %15 = arith.mulf %13, %14 : vector<16x256xf32>
    %c0_6 = arith.constant 0 : index
    %c0_7 = arith.constant 0 : index
    %16 = vector.load %arg3[%c0_6, %c0_7] : memref<16x256xf32, #tpu.memory_space<vmem>>, vector<16x256xf32>
    tpu.vector_store %arg3[%c0_6, %c0_7], %15 {strides = array<i32>} : memref<16x256xf32, #tpu.memory_space<vmem>>, vector<16x256xf32>,
    return
  }
  func.func @transform_0(%arg0: i32) -> (i32, i32) {
    %c0_i32 = arith.constant 0 : i32
    %c0_i32_0 = arith.constant 0 : i32
    return %arg0, %c0_i32 : i32, i32
  }
  func.func @transform_1(%arg0: i32) -> (i32, i32) {
    %c0_i32 = arith.constant 0 : i32
    %c0_i32_0 = arith.constant 0 : i32
    %c0_i32_1 = arith.constant 0 : i32
    return %c0_i32, %c0_i32_0 : i32, i32
  }
  func.func @transform_2(%arg0: i32) -> (i32, i32) {
    %c0_i32 = arith.constant 0 : i32
    %c0_i32_0 = arith.constant 0 : i32
    return %arg0, %c0_i32 : i32, i32
  }
}

</mosaic_0001>

<llo_original>
// kernel: tpu_custom_call.1
$region0: #{tpu_custom_call.1}
  #allocation0 [shape = 'u32[]', space=smem, size = 0x4, offset = 0x4, fixed_abs, tag = 'smem constant byte address 0x4 - core index']
  #allocation1 [shape = 'u32[144,128]{1,0:T(1,128)}', space=vmem, size = 0x12000, scoped, tag = 'internal scratch']
  %s0 = inlined_call_operand.hbm [shape: f32[18,256], index: 0, kind: input, shape index: {}]
  %s1 = inlined_call_operand.vmem [shape: f32[1,256], index: 1, kind: input, shape index: {}]
  %s2 = inlined_call_operand.hbm [shape: f32[18,256], index: 2, kind: output, shape index: {}]
  %s3 = sld [smem:[#allocation0]]
  $region45: #{tpu_custom_call.1} parent=0
    _
  %s5 = ssub.s32 1, %s3
  %s6 = scalar_select 0, %s5, %s3
  $region1: #{tpu_custom_call.1} parent=0
    #allocation2 [shape = 'u8[32768]{0}', space=vmem, size = 0x8000, scoped, tag = 'input window, operand 0']
    #allocation3 [shape = 's32[2]{0}', space=sflag, size = 0x8, scoped, tag = 'scoped memory for tpu_custom_call.1']
    #allocation4 [shape = 's32[2]{0}', space=sflag, size = 0x8, scoped, tag = 'scoped memory for tpu_custom_call.1']
    #allocation5 [shape = 'u8[32768]{0}', space=vmem, size = 0x8000, scoped, tag = 'output window, operand 0']
    %7 = vsyncpa [#allocation3], 0
    %s8 = scalar_lea.sflag [#allocation3], 1
    %9 = vsyncpa %s8, 0
    %10 = vsyncpa [#allocation4], 0
    %s11 = scalar_lea.sflag [#allocation4], 1
    %12 = vsyncpa %s11, 0
    loop: start=0, step=1, limit=4
    $region2: #{tpu_custom_call.1} parent=1 // loop_pre_header
      _
    $region3: #{tpu_custom_call.1} parent=1 // loop_header
      %s14 = sphi 0, %s18
      %p15 = scmp.ge.s32.totalorder %s14, 4
      %s24 = sphi 0, %s26
      %s27 = sphi 0, %s24
      %s28 = sphi 0, %s27
      %s44 = sphi 0, %s28
      %s48 = sphi 0, %s48
      %s50 = sphi 0, %s48
      %s51 = sphi 0, %s50
      %s65 = sphi 0, %s51
      %s71 = sphi 0, %s73
      %s74 = sphi 0, %s71
      %s75 = sphi 0, %s74
      %s91 = sphi 0, %s75
    $region4: #{tpu_custom_call.1} parent=1 // loop_header_branch
      %17 = sbr.rel (%p15) target = $region8
    $region5: #{tpu_custom_call.1} parent=1 // loop_body
      %s19 = ssub.s32 %s14, 1
      %s20 = ssub.s32 %s14, 2
      %s21 = sadd.s32 %s14, 1
      %s22 = ssub.s32 %s14, %s21
      %p23 = scmp.eq.s32.totalorder %s22, 0
      %s25 = sadd.s32 %s24, 1
      %s26 = scalar_select %p23, %s24, %s25
      %p29 = pneg %p23
      %p30 = scmp.eq.s32.totalorder %s14, 1
      %p31 = por %p29, %p30
      %p32 = scmp.ne.s32.totalorder %s24, %s27
      %p33 = scmp.eq.s32.totalorder %s14, 0
      %p34 = por %p32, %p33
      %p35 = scmp.ne.s32.totalorder %s24, %s27
      %p36 = scmp.eq.s32.totalorder %s19, 1
      %p37 = por %p35, %p36
      %p38 = scmp.ne.s32.totalorder %s27, %s28
      %p39 = scmp.eq.s32.totalorder %s19, 0
      %p40 = por %p38, %p39
      %p41 = scmp.ne.s32.totalorder %s27, %s28
      %p42 = scmp.eq.s32.totalorder %s20, 1
      %p43 = por %p41, %p42
      %p45 = scmp.ne.s32.totalorder %s28, %s44
      %p46 = scmp.eq.s32.totalorder %s20, 0
      %p47 = por %p45, %p46
      %s49 = sadd.s32 %s48, 1
      %p52 = scmp.eq.s32.totalorder %s14, 1
      %p53 = scmp.ne.s32.totalorder %s48, %s50
      %p54 = scmp.eq.s32.totalorder %s14, 0
      %p55 = por %p53, %p54
      %p56 = scmp.ne.s32.totalorder %s48, %s50
      %p57 = scmp.eq.s32.totalorder %s19, 1
      %p58 = por %p56, %p57
      %p59 = scmp.ne.s32.totalorder %s50, %s51
      %p60 = scmp.eq.s32.totalorder %s19, 0
      %p61 = por %p59, %p60
      %p62 = scmp.ne.s32.totalorder %s50, %s51
      %p63 = scmp.eq.s32.totalorder %s20, 1
      %p64 = por %p62, %p63
      %p66 = scmp.ne.s32.totalorder %s51, %s65
      %p67 = scmp.eq.s32.totalorder %s20, 0
      %p68 = por %p66, %p67
      %s69 = ssub.s32 %s14, %s21
      %p70 = scmp.eq.s32.totalorder %s69, 0
      %s72 = sadd.s32 %s71, 1
      %s73 = scalar_select %p70, %s71, %s72
      %p76 = pneg %p70
      %p77 = scmp.eq.s32.totalorder %s14, 1
      %p78 = por %p76, %p77
      %p79 = scmp.ne.s32.totalorder %s71, %s74
      %p80 = scmp.eq.s32.totalorder %s14, 0
      %p81 = por %p79, %p80
      %p82 = scmp.ne.s32.totalorder %s71, %s74
      %p83 = scmp.eq.s32.totalorder %s19, 1
      %p84 = por %p82, %p83
      %p85 = scmp.ne.s32.totalorder %s74, %s75
      %p86 = scmp.eq.s32.totalorder %s19, 0
      %p87 = por %p85, %p86
      %p88 = scmp.ne.s32.totalorder %s74, %s75
      %p89 = scmp.eq.s32.totalorder %s20, 1
      %p90 = por %p88, %p89
      %p92 = scmp.ne.s32.totalorder %s75, %s91
      %p93 = scmp.eq.s32.totalorder %s20, 0
      %p94 = por %p92, %p93
      %p95 = scmp.le.s32.totalorder 1, %s14
      %p96 = scmp.lt.s32.totalorder %s14, 3
      %p97 = pnand %p95, %p96
      %p98 = pneg %p97
      // Predicated region
      $region9: #{tpu_custom_call.1} parent=5 // pred_check
        _
      $region10: #{tpu_custom_call.1} parent=5 // pred_check_branch
        %100 = sbr.rel (%p97) target = $region12
      $region11: #{tpu_custom_call.1} parent=5 // pred_region
        %s101 = ssub.s32 %s14, 1
        // Predicated region
        $region13: #{tpu_custom_call.1} parent=11 // pred_check
          %p102 = pneg %p61
        $region14: #{tpu_custom_call.1} parent=11 // pred_check_branch
          %104 = sbr.rel (%p102) target = $region16
        $region15: #{tpu_custom_call.1} parent=11 // pred_region
          _
        $region16: #{tpu_custom_call.1} parent=11 // pred_fallthru
          _
      $region12: #{tpu_custom_call.1} parent=5 // pred_fallthru
        _
      %p105 = scmp.lt.s32.totalorder %s14, 2
      // Predicated region
      $region17: #{tpu_custom_call.1} parent=5 // pred_check
        %p106 = pneg %p105
      $region18: #{tpu_custom_call.1} parent=5 // pred_check_branch
        %108 = sbr.rel (%p106) target = $region20
      $region19: #{tpu_custom_call.1} parent=5 // pred_region
        // Predicated region
        $region21: #{tpu_custom_call.1} parent=19 // pred_check
          %p109 = pneg %p34
        $region22: #{tpu_custom_call.1} parent=19 // pred_check_branch
          %111 = sbr.rel (%p109) target = $region24
        $region23: #{tpu_custom_call.1} parent=19 // pred_region
          %s112 = sand.u32 %s24, 1
          %s113 = scalar_lea.sflag [#allocation3], %s112
          %s114 = sand.u32 %s24, 1
          %s115 = smul.addr %s114, 32
          %s116 = scalar_lea.vmem [#allocation2], %s115
          %s117 = smul.u32 2, %s14
          %s118 = ssub.s32 3, %s117
          %p119 = scmp.lt.s32.totalorder %s118, 2
          %s120 = scalar_select %p119, %s118, 2
          %s121 = smul.u32 128, %s120
          %s122 = smul.u32 %s121, 2
          %s124 = ssub.s32 512, %s122
          %125 = vsyncadd %s113, %s124
          %p126 = scmp.ne.s32.totalorder 0, %s122
          %s127 = smul.addr %s117, 2
          %s128 = smul.addr %s127, 128
          %s129 = scalar_lea.hbm %s0, %s128
          %s130 = smul.u32 16, %s120
          %s131 = sshll.u32 %s116, 4
          %s132 = int_to_ptr.vmem [resolvable:$true] %s131
          %s133 = sshll.u32 %s130, 4
          %137 = dma.hbm_to_vmem [thread:$0]  (%p126), %s129, %s133, %s132, %s113, 256, 256, 16
        $region24: #{tpu_custom_call.1} parent=19 // pred_fallthru
          _
      $region20: #{tpu_custom_call.1} parent=5 // pred_fallthru
        _
      %p138 = scmp.le.s32.totalorder 1, %s14
      %p139 = scmp.lt.s32.totalorder %s14, 3
      %p140 = pnand %p138, %p139
      %p141 = pneg %p140
      // Predicated region
      $region25: #{tpu_custom_call.1} parent=5 // pred_check
        _
      $region26: #{tpu_custom_call.1} parent=5 // pred_check_branch
        %143 = sbr.rel (%p140) target = $region28
      $region27: #{tpu_custom_call.1} parent=5 // pred_region
        %s144 = ssub.s32 %s14, 1
        %s145 = sand.u32 %s27, 1
        %s146 = scalar_lea.sflag [#allocation3], %s145
        %s147 = sand.u32 %s27, 1
        %s148 = smul.addr %s147, 32
        %s149 = scalar_lea.vmem [#allocation2], %s148
        // Predicated region
        $region29: #{tpu_custom_call.1} parent=27 // pred_check
          %p150 = pneg %p40
        $region30: #{tpu_custom_call.1} parent=27 // pred_check_branch
          %152 = sbr.rel (%p150) target = $region32
        $region31: #{tpu_custom_call.1} parent=27 // pred_region
          %153 = dma.done %s146, 512
        $region32: #{tpu_custom_call.1} parent=27 // pred_fallthru
          _
        %s154 = sand.u32 %s27, 1
        %s155 = scalar_lea.sflag [#allocation3], %s154
        %s156 = sand.u32 %s27, 1
        %s157 = smul.addr %s156, 32
        %s158 = scalar_lea.vmem [#allocation2], %s157
        %p159 = pneg %p40
        %p160 = pneg %p37
        %p161 = pneg %p61
        %p162 = pneg %p58
        %p163 = pneg %p87
        %p164 = pneg %p84
        %s165 = sand.u32 %s74, 1
        %s166 = scalar_lea.sflag [#allocation4], %s165
        %s167 = sand.u32 %s74, 1
        %s168 = smul.addr %s167, 32
        %s169 = scalar_lea.vmem [#allocation5], %s168
        %s170 = smul.u32 2, %s19
        %s171 = ssub.s32 3, %s170
        %p172 = scmp.lt.s32.totalorder %s171, 2
        %s173 = scalar_select %p172, %s171, 2
        %s174 = smul.u32 128, %s173
        %s175 = smul.u32 %s174, 2
        %s176 = smul.u32 2, %s19
        %s177 = ssub.s32 3, %s176
        %p178 = scmp.lt.s32.totalorder %s177, 2
        %s179 = scalar_select %p178, %s177, 2
        %s180 = smul.u32 128, %s179
        %s181 = smul.u32 %s180, 2
        %v182 = vld [vmem:[%s149] sm:$0xff]
        %v183 = vld [vmem:[%s149 + $0x8] sm:$0xff]
        %v184 = vld [vmem:[%s149 + $0x10] sm:$0xff]
        %v185 = vld [vmem:[%s149 + $0x18] sm:$0xff]
        %v186 = vmul.f32 %v182, %v182
        %v187 = vmul.f32 %v183, %v183
        %v188 = vmul.f32 %v184, %v184
        %v189 = vmul.f32 %v185, %v185
        %v190 = vadd.f32 %v186, %v187
        %191 = vadd.xlane.f32.xlu0 %v190
        %v192 = vpop.xlane.xlu0 %191
        %v193 = vadd.f32 %v188, %v189
        %194 = vadd.xlane.f32.xlu0 %v193
        %v195 = vpop.xlane.xlu0 %194
        %v196 = vrcp.pop 256.0
        %v197 = vmul.f32 %v192, %v196
        %v198 = vmul.f32 %v195, %v196
        %v199 = vadd.f32 %v197, 1e-06
        %v200 = vadd.f32 %v198, 1e-06
        %v201 = vrsqrt.pop %v199
        %v202 = vrsqrt.pop %v200
        %v203 = vld [vmem:[%s1] sm:$0x3]
        %v204 = vadd.f32 %v203, 1.0
        %v205 = vmul.f32 %v182, %v201
        %v206 = vmul.f32 %v183, %v201
        %v207 = vmul.f32 %v184, %v202
        %v208 = vmul.f32 %v185, %v202
        %v210 = vlaneseq
        %v211 = vshrl.u32 %v210, 7
        %v212 = vsub.s32 0, %v211
        %v213 = vrot.slane %v204, %v212
        %v214 = vlaneseq
        %v215 = vshrl.u32 %v214, 7
        %v216 = vsub.s32 1, %v215
        %v217 = vrot.slane %v204, %v216
        %v220 = vmul.f32 %v205, %v213
        %v221 = vmul.f32 %v206, %v217
        %v222 = vmul.f32 %v207, %v213
        %v223 = vmul.f32 %v208, %v217
        %224 = vst [vmem:[%s169] sm:$0xff] %v220
        %225 = vst [vmem:[%s169 + $0x8] sm:$0xff] %v221
        %226 = vst [vmem:[%s169 + $0x10] sm:$0xff] %v222
        %227 = vst [vmem:[%s169 + $0x18] sm:$0xff] %v223
        %s228 = sand.u32 %s74, 1
        %s229 = scalar_lea.sflag [#allocation4], %s228
        %s230 = sand.u32 %s74, 1
        %s231 = smul.addr %s230, 32
        %s232 = scalar_lea.vmem [#allocation5], %s231
        // Predicated region
        $region33: #{tpu_custom_call.1} parent=27 // pred_check
          %p233 = pneg %p84
        $region34: #{tpu_custom_call.1} parent=27 // pred_check_branch
          %235 = sbr.rel (%p233) target = $region36
        $region35: #{tpu_custom_call.1} parent=27 // pred_region
          %s236 = smul.u32 2, %s19
          %s237 = ssub.s32 3, %s236
          %p238 = scmp.lt.s32.totalorder %s237, 2
          %s239 = scalar_select %p238, %s237, 2
          %s240 = smul.u32 128, %s239
          %s241 = smul.u32 %s240, 2
          %s243 = ssub.s32 512, %s241
          %244 = vsyncadd %s229, %s243
          %p245 = scmp.ne.s32.totalorder 0, %s241
          %s246 = smul.addr %s236, 2
          %s247 = smul.addr %s246, 128
          %s248 = scalar_lea.hbm %s2, %s247
          %s249 = smul.u32 16, %s239
          %s250 = sshll.u32 %s232, 4
          %s251 = int_to_ptr.vmem [resolvable:$true] %s250
          %s252 = sshll.u32 %s249, 4
          %256 = dma.vmem_to_hbm [thread:$0]  (%p245), %s251, %s252, %s248, %s229, 256, 256, 16
        $region36: #{tpu_custom_call.1} parent=27 // pred_fallthru
          _
      $region28: #{tpu_custom_call.1} parent=5 // pred_fallthru
        _
      %p257 = scmp.le.s32.totalorder 2, %s14
      // Predicated region
      $region37: #{tpu_custom_call.1} parent=5 // pred_check
        %p258 = pneg %p257
      $region38: #{tpu_custom_call.1} parent=5 // pred_check_branch
        %260 = sbr.rel (%p258) target = $region40
      $region39: #{tpu_custom_call.1} parent=5 // pred_region
        %s261 = ssub.s32 %s14, 2
        // Predicated region
        $region41: #{tpu_custom_call.1} parent=39 // pred_check
          %p262 = pneg %p90
        $region42: #{tpu_custom_call.1} parent=39 // pred_check_branch
          %264 = sbr.rel (%p262) target = $region44
        $region43: #{tpu_custom_call.1} parent=39 // pred_region
          %s265 = sand.u32 %s75, 1
          %s266 = scalar_lea.sflag [#allocation4], %s265
          %s267 = sand.u32 %s75, 1
          %s268 = smul.addr %s267, 32
          %s269 = scalar_lea.vmem [#allocation5], %s268
          %270 = dma.done %s266, 512
        $region44: #{tpu_custom_call.1} parent=39 // pred_fallthru
          _
      $region40: #{tpu_custom_call.1} parent=5 // pred_fallthru
        _
    $region6: #{tpu_custom_call.1} parent=1 // loop_footer
      %s18 = sadd.s32 1, %s14
    $region7: #{tpu_custom_call.1} parent=1 // loop_footer_branch
      %13 = sbr.rel target = $region3
    $region8: #{tpu_custom_call.1} parent=1 // loop_exit
      _
    %271 = vsyncpa [#allocation3], 1
    %s272 = scalar_lea.sflag [#allocation3], 1
    %273 = vsyncpa %s272, 1
    %274 = vsyncpa [#allocation4], 1
    %s275 = scalar_lea.sflag [#allocation4], 1
    %276 = vsyncpa %s275, 1

</llo_original>
